<compile_context>
chip_gen: v6e
topology: v6e:2x2x1
jax: 0.10.0
libtpu: 0.0.40
codegen_flags: <defaults>
</compile_context>

<pallas_src>
import functools

import jax
import jax.numpy as jnp
from jax.experimental import pallas as pl
from jax.experimental.pallas import tpu as pltpu


def _pick_tile(total, target, align):
    """Largest multiple of `align` that divides `total` and is <= target.

    Falls back to the full extent (always a legal block dim)."""
    if total <= target:
        return total
    t = min(target, total)
    t -= t % align
    while t >= align:
        if total % t == 0:
            return t
        t -= align
    return total


def _largest_divisor_leq(total, cap):
    d = max(1, min(total, cap))
    while total % d != 0:
        d -= 1
    return d


# --------------------------------------------------------------------------
# Kernel 1: fused QKV projection  (bs*n, dim_p) @ (dim_p, 3*dim_p) + bias
#           -> single lane-dense (tm, tn) output block per grid step.
# --------------------------------------------------------------------------
def qkv_proj_kernel(x_ref, w_ref, b_ref, o_ref):
    o_ref[...] = (jnp.dot(x_ref[...], w_ref[...],
                          preferred_element_type=jnp.float32)
                  + b_ref[...]).astype(o_ref.dtype)


# --------------------------------------------------------------------------
# Kernel 2: streamed AFT aggregation (pure matmul accumulation)
#   acc[b] += eB_tile @ [ek*v | ek]_tile     (f32 accumulator)
#   finalize: out = sigmoid(q) * num / den
# --------------------------------------------------------------------------
def aft_core_kernel(q_ref, kv_ref, eB_ref, o_ref, acc_ref, *, nb, dim_p):
    ki = pl.program_id(2)
    nk = pl.num_programs(2)

    @pl.when(ki == 0)
    def _init():
        acc_ref[...] = jnp.zeros_like(acc_ref)

    eB = eB_ref[...]                                  # (tq, tk)
    for b in range(nb):                               # static, small
        acc_ref[b] += jnp.dot(eB, kv_ref[b],
                              preferred_element_type=jnp.float32)

    @pl.when(ki == nk - 1)
    def _finalize():
        acc = acc_ref[...]                            # (nb, tq, 2*dim_p) f32
        num = acc[:, :, :dim_p]
        den = acc[:, :, dim_p:]
        den = jnp.maximum(den, jnp.finfo(jnp.float32).tiny)   # underflow guard
        inv = pl.reciprocal(den, approx=True)                 # EUP
        inv = inv * (2.0 - den * inv)                         # Newton -> f32 accurate
        q = q_ref[...].astype(jnp.float32)
        o_ref[...] = (jax.nn.sigmoid(q) * num * inv).astype(o_ref.dtype)


# --------------------------------------------------------------------------
# Wrapper
# --------------------------------------------------------------------------
def aft_full(x, wq, bq, wk, bk, wv, bv, pos_biases, *,
             q_tile=256, k_tile=256, m_tile=512, n_tile=512,
             batch_block=4, stream_dtype=None):
    """x: (bs, n, dim); wq/wk/wv: (dim, dim) PyTorch layout (out, in);
    bq/bk/bv: (dim,); pos_biases: (n, n).

    stream_dtype: dtype of the streamed matmul operands (eB and [ek*v|ek]).
    Defaults to x.dtype; pass jnp.bfloat16 for halved HBM traffic on
    v6e/v7x at a small accuracy cost."""
    bs, n, dim = x.shape
    dtype = x.dtype
    f32 = jnp.float32
    if stream_dtype is None:
        stream_dtype = dtype

    # ---- lane padding to a multiple of 128 ----------------------------------
    dim_p = max(128, ((dim + 127) // 128) * 128)
    pad_d = dim_p - dim
    sub_align = 16 if dtype == jnp.bfloat16 else 8

    # ---- fused QKV projection -----------------------------------------------
    def _prep_w(w):                       # (out, in) -> (in_p, out_p), zero-padded
        wt = jnp.asarray(w).T.astype(dtype)
        return jnp.pad(wt, ((0, pad_d), (0, pad_d)))

    def _prep_b(b):
        return jnp.pad(jnp.asarray(b).astype(f32), (0, pad_d))

    w_qkv = jnp.concatenate([_prep_w(wq), _prep_w(wk), _prep_w(wv)], axis=1)
    b_qkv = jnp.concatenate([_prep_b(bq), _prep_b(bk), _prep_b(bv)]
                            ).reshape(1, 3 * dim_p)

    x2d = x.reshape(bs * n, dim)
    if pad_d:
        x2d = jnp.pad(x2d, ((0, 0), (0, pad_d)))

    m_total = bs * n
    tm = _pick_tile(m_total, m_tile, sub_align)
    tn = _pick_tile(3 * dim_p, n_tile, 128)

    qkv2d = pl.pallas_call(
        qkv_proj_kernel,
        out_shape=jax.ShapeDtypeStruct((m_total, 3 * dim_p), dtype),
        grid_spec=pltpu.PrefetchScalarGridSpec(
            num_scalar_prefetch=0,
            grid=(m_total // tm, (3 * dim_p) // tn),
            in_specs=[
                pl.BlockSpec((tm, dim_p), lambda i, j: (i, 0)),     # x rows
                pl.BlockSpec((dim_p, tn), lambda i, j: (0, j)),     # weight tile
                pl.BlockSpec((1, tn), lambda i, j: (0, j)),         # bias tile
            ],
            out_specs=pl.BlockSpec((tm, tn), lambda i, j: (i, j)),
        ),
        compiler_params=pltpu.CompilerParams(
            dimension_semantics=("parallel", "parallel")),
    )(x2d, w_qkv, b_qkv)

    qkv = qkv2d.reshape(bs, n, 3 * dim_p)
    q = qkv[..., :dim_p]                               # stays in activation dtype
    k = qkv[..., dim_p:2 * dim_p].astype(f32)
    v = qkv[..., 2 * dim_p:].astype(f32)

    # ---- cheap JAX prepass: stabilized exp factors, fused [ek*v | ek] -------
    # exp(k + B) = exp(B - rowmax(B)) * exp(k - colmax(k)) * (cancelling scales)
    k_max = jnp.max(k, axis=1, keepdims=True)          # (bs, 1, dim_p)
    ek = jnp.exp(k - k_max)
    kv_fused = jnp.concatenate([ek * v, ek], axis=-1).astype(stream_dtype)

    B = pos_biases.astype(f32)
    eB = jnp.exp(B - jnp.max(B, axis=1, keepdims=True)).astype(stream_dtype)

    # ---- tiled, batch-blocked, streamed aggregation --------------------------
    tq = _pick_tile(n, q_tile, sub_align)
    tk = _pick_tile(n, k_tile, 128)
    nb = _largest_divisor_leq(bs, batch_block)

    kernel = functools.partial(aft_core_kernel, nb=nb, dim_p=dim_p)

    out_p = pl.pallas_call(
        kernel,
        out_shape=jax.ShapeDtypeStruct((bs, n, dim_p), dtype),
        grid_spec=pltpu.PrefetchScalarGridSpec(
            num_scalar_prefetch=0,
            grid=(bs // nb, n // tq, n // tk),
            in_specs=[
                pl.BlockSpec((nb, tq, dim_p), lambda b, qi, ki: (b, qi, 0)),     # q
                pl.BlockSpec((nb, tk, 2 * dim_p), lambda b, qi, ki: (b, ki, 0)), # [ek*v|ek]
                pl.BlockSpec((tq, tk), lambda b, qi, ki: (qi, ki)),              # exp(B-max)
            ],
            out_specs=pl.BlockSpec((nb, tq, dim_p), lambda b, qi, ki: (b, qi, 0)),
            scratch_shapes=[
                pltpu.VMEM((nb, tq, 2 * dim_p), jnp.float32),   # fused num|den acc
            ],
        ),
        compiler_params=pltpu.CompilerParams(
            dimension_semantics=("parallel", "parallel", "arbitrary")),
    )(q, kv_fused, eB)

    return out_p[..., :dim] if pad_d else out_p


# --------------------------------------------------------------------------
# Pure-JAX mirror of the PyTorch forward (correctness reference)
# --------------------------------------------------------------------------
def aft_full_reference(x, wq, bq, wk, bk, wv, bv, pos_biases):
    bs, n, dim = x.shape
    q = x @ wq.T + bq
    k = (x @ wk.T + bk).reshape(1, bs, n, dim)
    v = (x @ wv.T + bv).reshape(1, bs, n, dim)
    B = pos_biases.reshape(n, 1, n, 1)
    e = jnp.exp(k + B)                       # (n, bs, n, dim)
    numerator = jnp.sum(e * v, axis=2)       # (n, bs, dim)
    denominator = jnp.sum(e, axis=2)         # (n, bs, dim)
    out = numerator / denominator
    return jax.nn.sigmoid(q) * jnp.transpose(out, (1, 0, 2))


if __name__ == "__main__":
    # ---- Test 1: small shapes matching the module (d_model=32, n=8, bs=2) ----
    bs, n, d_model = 2, 8, 32
    key = jax.random.PRNGKey(0)
    kx, kq, kk_, kv = jax.random.split(key, 4)

    x = jax.random.normal(kx, (bs, n, d_model), dtype=jnp.float32)
    # Matches the PyTorch init_weights(): Linear weights ~ N(0, 0.001),
    # biases = 0, position_biases = ones((n, n)) (simple=False path).
    wq = 0.001 * jax.random.normal(kq, (d_model, d_model), dtype=jnp.float32)
    wk = 0.001 * jax.random.normal(kk_, (d_model, d_model), dtype=jnp.float32)
    wv = 0.001 * jax.random.normal(kv, (d_model, d_model), dtype=jnp.float32)
    bq = jnp.zeros((d_model,), jnp.float32)
    bk = jnp.zeros((d_model,), jnp.float32)
    bv = jnp.zeros((d_model,), jnp.float32)
    pos_biases = jnp.ones((n, n), dtype=jnp.float32)

    out = jax.block_until_ready(aft_full(x, wq, bq, wk, bk, wv, bv, pos_biases))
    ref = aft_full_reference(x, wq, bq, wk, bk, wv, bv, pos_biases)
    assert out.shape == (bs, n, d_model)
    assert jnp.allclose(out, ref, atol=1e-4, rtol=1e-4), "mismatch vs reference (small)"

    # ---- Test 2: exercise the tiled / multi-key-tile accumulation path ------
    n2 = 256
    k2a, k2b = jax.random.split(jax.random.PRNGKey(1))
    x2 = jax.random.normal(k2a, (bs, n2, d_model), dtype=jnp.float32)
    pos2 = jax.random.normal(k2b, (n2, n2), dtype=jnp.float32)
    out2 = jax.block_until_ready(
        aft_full(x2, wq, bq, wk, bk, wv, bv, pos2, q_tile=128, k_tile=128))
    ref2 = aft_full_reference(x2, wq, bq, wk, bk, wv, bv, pos2)
    assert jnp.allclose(out2, ref2, atol=1e-4, rtol=1e-4), "mismatch vs reference (tiled)"

    print("KERNEL_OK")
</pallas_src>

<mosaic_0001>
module attributes {stable_mosaic.version = 11 : i64} {
  func.func @qkv_proj_kernel(%arg0: i32, %arg1: i32, %arg2: memref<16x128xf32, #tpu.memory_space<vmem>>, %arg3: memref<128x384xf32, #tpu.memory_space<vmem>>, %arg4: memref<1x384xf32, #tpu.memory_space<vmem>>, %arg5: memref<16x384xf32, #tpu.memory_space<vmem>>) attributes {dimension_semantics = [#tpu.dimension_semantics<parallel>, #tpu.dimension_semantics<parallel>], iteration_bounds = array<i64: 1, 1>, scalar_prefetch = 0 : i64, scratch_operands = 0 : i64, tpu.core_type = #tpu.core_type<tc>, window_params = [{transform_indices = @transform_0, window_bounds = array<i64: 16, 128>}, {transform_indices = @transform_1, window_bounds = array<i64: 128, 384>}, {transform_indices = @transform_2, window_bounds = array<i64: 1, 384>}, {transform_indices = @transform_3, window_bounds = array<i64: 16, 384>}]} {
    %c0 = arith.constant 0 : index
    %c0_0 = arith.constant 0 : index
    %0 = vector.load %arg2[%c0, %c0_0] : memref<16x128xf32, #tpu.memory_space<vmem>>, vector<16x128xf32>
    %c0_1 = arith.constant 0 : index
    %c0_2 = arith.constant 0 : index
    %1 = vector.load %arg3[%c0_1, %c0_2] : memref<128x384xf32, #tpu.memory_space<vmem>>, vector<128x384xf32>
    %cst = arith.constant dense<0.000000e+00> : vector<16x384xf32>
    %2 = tpu.matmul %0, %1, %cst {dimension_numbers = #tpu.dot_dimension_numbers<[1], [0], [0], [1], [0, 0, 1, 1], [], []>} : vector<16x128xf32>, vector<128x384xf32>, vector<16x384xf32> -> vector<16x384xf32>
    %c0_3 = arith.constant 0 : index
    %c0_4 = arith.constant 0 : index
    %3 = vector.load %arg4[%c0_3, %c0_4] : memref<1x384xf32, #tpu.memory_space<vmem>>, vector<1x384xf32>
    %4 = vector.broadcast %3 : vector<1x384xf32> to vector<16x384xf32>
    %5 = arith.addf %2, %4 : vector<16x384xf32>
    %c0_5 = arith.constant 0 : index
    %c0_6 = arith.constant 0 : index
    %6 = vector.load %arg5[%c0_5, %c0_6] : memref<16x384xf32, #tpu.memory_space<vmem>>, vector<16x384xf32>
    tpu.vector_store %arg5[%c0_5, %c0_6], %5 {strides = array<i32>} : memref<16x384xf32, #tpu.memory_space<vmem>>, vector<16x384xf32>,
    return
  }
  func.func @transform_0(%arg0: i32, %arg1: i32) -> (i32, i32) {
    %c0_i32 = arith.constant 0 : i32
    %c0_i32_0 = arith.constant 0 : i32
    return %arg0, %c0_i32 : i32, i32
  }
  func.func @transform_1(%arg0: i32, %arg1: i32) -> (i32, i32) {
    %c0_i32 = arith.constant 0 : i32
    %c0_i32_0 = arith.constant 0 : i32
    return %c0_i32, %arg1 : i32, i32
  }
  func.func @transform_2(%arg0: i32, %arg1: i32) -> (i32, i32) {
    %c0_i32 = arith.constant 0 : i32
    %c0_i32_0 = arith.constant 0 : i32
    return %c0_i32, %arg1 : i32, i32
  }
  func.func @transform_3(%arg0: i32, %arg1: i32) -> (i32, i32) {
    %c0_i32 = arith.constant 0 : i32
    return %arg0, %arg1 : i32, i32
  }
}

</mosaic_0001>

<llo_original>
// kernel: tpu_custom_call.1
$region0: #{tpu_custom_call.1}
  #allocation0 [shape = 'u32[]', space=smem, size = 0x4, offset = 0x4, fixed_abs, tag = 'smem constant byte address 0x4 - core index']
  #allocation1 [shape = 'u32[144,128]{1,0:T(1,128)}', space=vmem, size = 0x12000, scoped, tag = 'internal scratch']
  %s0 = inlined_call_operand.hbm [shape: f32[16,128], index: 0, kind: input, shape index: {}]
  %s1 = inlined_call_operand.hbm [shape: f32[128,384], index: 1, kind: input, shape index: {}]
  %s2 = inlined_call_operand.vmem [shape: f32[1,384], index: 2, kind: input, shape index: {}]
  %s3 = inlined_call_operand.hbm [shape: f32[16,384], index: 3, kind: output, shape index: {}]
  %s4 = sld [smem:[#allocation0]]
  $region30: #{tpu_custom_call.1} parent=0
    _
  %s6 = ssub.s32 1, %s4
  %s7 = scalar_select 0, %s6, %s4
  $region1: #{tpu_custom_call.1} parent=0
    #allocation2 [shape = 'u8[8192]{0}', space=vmem, size = 0x2000, scoped, tag = 'input window, operand 0, single buffered']
    #allocation3 [shape = 's32[1]{0}', space=sflag, size = 0x4, scoped, tag = 'scoped memory for tpu_custom_call.1']
    #allocation4 [shape = 's32[1]{0}', space=sflag, size = 0x4, scoped, tag = 'scoped memory for tpu_custom_call.1']
    #allocation5 [shape = 'u8[196608]{0}', space=vmem, size = 0x30000, scoped, tag = 'input window, operand 1, single buffered']
    #allocation6 [shape = 's32[1]{0}', space=sflag, size = 0x4, scoped, tag = 'scoped memory for tpu_custom_call.1']
    #allocation7 [shape = 'u8[24576]{0}', space=vmem, size = 0x6000, scoped, tag = 'output window, operand 0, single buffered']
    %8 = vsyncpa [#allocation3], 0
    %9 = vsyncpa [#allocation6], 0
    %10 = vsyncpa [#allocation4], 0
    // Predicated region
    $region2: #{tpu_custom_call.1} parent=1 // pred_check
      _
    $region3: #{tpu_custom_call.1} parent=1 // pred_check_branch
      %12 = sbr.rel (0) target = $region5
    $region4: #{tpu_custom_call.1} parent=1 // pred_region
      %s14 = ssub.s32 256, 256
      %15 = vsyncadd [#allocation3], %s14
      %s16 = sshll.u32 [#allocation2], 4
      %s17 = int_to_ptr.vmem [resolvable:$true] %s16
      %22 = dma.hbm_to_vmem [thread:$0]  %s0, 256, %s17, [#allocation3], 128, 128, 8
    $region5: #{tpu_custom_call.1} parent=1 // pred_fallthru
      _
    // Predicated region
    $region6: #{tpu_custom_call.1} parent=1 // pred_check
      _
    $region7: #{tpu_custom_call.1} parent=1 // pred_check_branch
      %24 = sbr.rel (0) target = $region9
    $region8: #{tpu_custom_call.1} parent=1 // pred_region
      %s26 = ssub.s32 6144, 6144
      %27 = vsyncadd [#allocation6], %s26
      %s28 = sshll.u32 [#allocation5], 4
      %s29 = int_to_ptr.vmem [resolvable:$true] %s28
      %34 = dma.hbm_to_vmem [thread:$0]  %s1, 6144, %s29, [#allocation6], 384, 384, 24
    $region9: #{tpu_custom_call.1} parent=1 // pred_fallthru
      _
    // Predicated region
    $region10: #{tpu_custom_call.1} parent=1 // pred_check
      _
    $region11: #{tpu_custom_call.1} parent=1 // pred_check_branch
      %36 = sbr.rel (0) target = $region13
    $region12: #{tpu_custom_call.1} parent=1 // pred_region
      _
    $region13: #{tpu_custom_call.1} parent=1 // pred_fallthru
      _
    // Predicated region
    $region14: #{tpu_custom_call.1} parent=1 // pred_check
      _
    $region15: #{tpu_custom_call.1} parent=1 // pred_check_branch
      %38 = sbr.rel (0) target = $region17
    $region16: #{tpu_custom_call.1} parent=1 // pred_region
      %39 = dma.done [#allocation3], 256
    $region17: #{tpu_custom_call.1} parent=1 // pred_fallthru
      _
    // Predicated region
    $region18: #{tpu_custom_call.1} parent=1 // pred_check
      _
    $region19: #{tpu_custom_call.1} parent=1 // pred_check_branch
      %41 = sbr.rel (0) target = $region21
    $region20: #{tpu_custom_call.1} parent=1 // pred_region
      %42 = dma.done [#allocation6], 6144
    $region21: #{tpu_custom_call.1} parent=1 // pred_fallthru
      _
    %v43 = vld [vmem:[#allocation2] sm:$0xff]
    %v44 = vld [vmem:[#allocation2 + $0x8] sm:$0xff]
    %v45 = vld [vmem:[#allocation5] sm:$0xff]
    %v46 = vld [vmem:[#allocation5 + $0x8] sm:$0xff]
    %v47 = vld [vmem:[#allocation5 + $0x10] sm:$0xff]
    %v48 = vld [vmem:[#allocation5 + $0x18] sm:$0xff]
    %v49 = vld [vmem:[#allocation5 + $0x20] sm:$0xff]
    %v50 = vld [vmem:[#allocation5 + $0x28] sm:$0xff]
    %v51 = vld [vmem:[#allocation5 + $0x30] sm:$0xff]
    %v52 = vld [vmem:[#allocation5 + $0x38] sm:$0xff]
    %v53 = vld [vmem:[#allocation5 + $0x40] sm:$0xff]
    %v54 = vld [vmem:[#allocation5 + $0x48] sm:$0xff]
    %v55 = vld [vmem:[#allocation5 + $0x50] sm:$0xff]
    %v56 = vld [vmem:[#allocation5 + $0x58] sm:$0xff]
    %v57 = vld [vmem:[#allocation5 + $0x60] sm:$0xff]
    %v58 = vld [vmem:[#allocation5 + $0x68] sm:$0xff]
    %v59 = vld [vmem:[#allocation5 + $0x70] sm:$0xff]
    %v60 = vld [vmem:[#allocation5 + $0x78] sm:$0xff]
    %v61 = vld [vmem:[#allocation5 + $0x80] sm:$0xff]
    %v62 = vld [vmem:[#allocation5 + $0x88] sm:$0xff]
    %v63 = vld [vmem:[#allocation5 + $0x90] sm:$0xff]
    %v64 = vld [vmem:[#allocation5 + $0x98] sm:$0xff]
    %v65 = vld [vmem:[#allocation5 + $0xa0] sm:$0xff]
    %v66 = vld [vmem:[#allocation5 + $0xa8] sm:$0xff]
    %v67 = vld [vmem:[#allocation5 + $0xb0] sm:$0xff]
    %v68 = vld [vmem:[#allocation5 + $0xb8] sm:$0xff]
    %v69 = vld [vmem:[#allocation5 + $0xc0] sm:$0xff]
    %v70 = vld [vmem:[#allocation5 + $0xc8] sm:$0xff]
    %v71 = vld [vmem:[#allocation5 + $0xd0] sm:$0xff]
    %v72 = vld [vmem:[#allocation5 + $0xd8] sm:$0xff]
    %v73 = vld [vmem:[#allocation5 + $0xe0] sm:$0xff]
    %v74 = vld [vmem:[#allocation5 + $0xe8] sm:$0xff]
    %v75 = vld [vmem:[#allocation5 + $0xf0] sm:$0xff]
    %v76 = vld [vmem:[#allocation5 + $0xf8] sm:$0xff]
    %v77 = vld [vmem:[#allocation5 + $0x100] sm:$0xff]
    %v78 = vld [vmem:[#allocation5 + $0x108] sm:$0xff]
    %v79 = vld [vmem:[#allocation5 + $0x110] sm:$0xff]
    %v80 = vld [vmem:[#allocation5 + $0x118] sm:$0xff]
    %v81 = vld [vmem:[#allocation5 + $0x120] sm:$0xff]
    %v82 = vld [vmem:[#allocation5 + $0x128] sm:$0xff]
    %v83 = vld [vmem:[#allocation5 + $0x130] sm:$0xff]
    %v84 = vld [vmem:[#allocation5 + $0x138] sm:$0xff]
    %v85 = vld [vmem:[#allocation5 + $0x140] sm:$0xff]
    %v86 = vld [vmem:[#allocation5 + $0x148] sm:$0xff]
    %v87 = vld [vmem:[#allocation5 + $0x150] sm:$0xff]
    %v88 = vld [vmem:[#allocation5 + $0x158] sm:$0xff]
    %v89 = vld [vmem:[#allocation5 + $0x160] sm:$0xff]
    %v90 = vld [vmem:[#allocation5 + $0x168] sm:$0xff]
    %v91 = vld [vmem:[#allocation5 + $0x170] sm:$0xff]
    %v92 = vld [vmem:[#allocation5 + $0x178] sm:$0xff]
    %v93 = vld [vmem:[%s2] sm:$0x7]
    %v95 = vlaneseq
    %v96 = vshrl.u32 %v95, 7
    %v97 = vsub.s32 0, %v96
    %v98 = vrot.slane %v93, %v97
    %v99 = vlaneseq
    %v100 = vshrl.u32 %v99, 7
    %v101 = vsub.s32 1, %v100
    %v102 = vrot.slane %v93, %v101
    %v103 = vlaneseq
    %v104 = vshrl.u32 %v103, 7
    %v105 = vsub.s32 2, %v104
    %v106 = vrot.slane %v93, %v105
    %110 = vmatprep.subr.mxu0 %v91
    %111 = vmatpush1.msra.mxu0 %v90
    %112 = vmatprep.subr.mxu0 %v88
    %113 = vmatpush1.msra.mxu0 %v87
    %114 = vmatprep.subr.mxu0 %v85
    %115 = vmatpush1.msra.mxu0 %v84
    %116 = vmatprep.subr.mxu0 %v82
    %117 = vmatpush1.msra.mxu0 %v81
    %118 = vmatprep.subr.mxu0 %v79
    %119 = vmatpush1.msra.mxu0 %v78
    %120 = vmatprep.subr.mxu0 %v76
    %121 = vmatpush1.msra.mxu0 %v75
    %122 = vmatprep.subr.mxu0 %v73
    %123 = vmatpush1.msra.mxu0 %v72
    %124 = vmatprep.subr.mxu0 %v70
    %125 = vmatpush1.msra.mxu0 %v69
    %126 = vmatprep.subr.mxu0 %v67
    %127 = vmatpush1.msra.mxu0 %v66
    %128 = vmatprep.subr.mxu0 %v64
    %129 = vmatpush1.msra.mxu0 %v63
    %130 = vmatprep.subr.mxu0 %v61
    %131 = vmatpush1.msra.mxu0 %v60
    %132 = vmatprep.subr.mxu0 %v58
    %133 = vmatpush1.msra.mxu0 %v57
    %134 = vmatprep.subr.mxu0 %v55
    %135 = vmatpush1.msra.mxu0 %v54
    %136 = vmatprep.subr.mxu0 %v52
    %137 = vmatpush1.msra.mxu0 %v51
    %138 = vmatprep.subr.mxu0 %v49
    %139 = vmatpush1.msra.mxu0 %v48
    %140 = vmatprep.subr.mxu0 %v46
    %141 = vmatpush1.msra.mxu0 %v45
    %142 = vmatprep.subr.mxu0 0.0
    %143 = vmatpush2.msra.mxu0 0.0
    %144 = vmatprep.subr.mxu0 0.0
    %145 = vmatpush2.msra.mxu0 0.0
    %146 = vmatprep.subr.mxu0 0.0
    %147 = vmatpush2.msra.mxu0 0.0
    %148 = vmatprep.subr.mxu0 0.0
    %149 = vmatpush2.msra.mxu0 0.0
    %150 = vmatprep.subr.mxu0 0.0
    %151 = vmatpush2.msra.mxu0 0.0
    %152 = vmatprep.subr.mxu0 0.0
    %153 = vmatpush2.msra.mxu0 0.0
    %154 = vmatprep.subr.mxu0 0.0
    %155 = vmatpush2.msra.mxu0 0.0
    %156 = vmatprep.subr.mxu0 0.0
    %157 = vmatpush2.msra.mxu0 0.0
    %158 = vmatprep.subr.mxu0 0.0
    %159 = vmatpush2.msra.mxu0 0.0
    %160 = vmatprep.subr.mxu0 0.0
    %161 = vmatpush2.msra.mxu0 0.0
    %162 = vmatprep.subr.mxu0 0.0
    %163 = vmatpush2.msra.mxu0 0.0
    %164 = vmatprep.subr.mxu0 0.0
    %165 = vmatpush2.msra.mxu0 0.0
    %166 = vmatprep.subr.mxu0 0.0
    %167 = vmatpush2.msra.mxu0 0.0
    %168 = vmatprep.subr.mxu0 0.0
    %169 = vmatpush2.msra.mxu0 0.0
    %170 = vmatprep.subr.mxu0 0.0
    %171 = vmatpush2.msra.mxu0 0.0
    %172 = vmatprep.subr.mxu0 0.0
    %173 = vmatpush2.msra.mxu0 0.0
    %174 = vmatprep.mubr.f32.mxu0 0.0
    %175 = vmatmul.mubr.f32.gmra.mxu0 %v43
    %v176 = vpop.f32.mrf.mxu0
    %v177 = vadd.f32 %v98, %v176
    %v178 = vpop.f32.mrf.mxu0
    %v179 = vadd.f32 %v102, %v178
    %180 = vmatprep.mubr.f32.mxu0 0.0
    %181 = vmatmul.mubr.f32.gmra.mxu0 %v44
    %v182 = vpop.f32.mrf.mxu0
    %v183 = vadd.f32 %v98, %v182
    %v184 = vpop.f32.mrf.mxu0
    %v185 = vadd.f32 %v102, %v184
    %186 = vdwg.mxu0
    %187 = vmatprep.subr.mxu0 0.0
    %188 = vmatpush1.msra.mxu0 %v92
    %189 = vmatprep.subr.mxu0 0.0
    %190 = vmatpush1.msra.mxu0 %v89
    %191 = vmatprep.subr.mxu0 0.0
    %192 = vmatpush1.msra.mxu0 %v86
    %193 = vmatprep.subr.mxu0 0.0
    %194 = vmatpush1.msra.mxu0 %v83
    %195 = vmatprep.subr.mxu0 0.0
    %196 = vmatpush1.msra.mxu0 %v80
    %197 = vmatprep.subr.mxu0 0.0
    %198 = vmatpush1.msra.mxu0 %v77
    %199 = vmatprep.subr.mxu0 0.0
    %200 = vmatpush1.msra.mxu0 %v74
    %201 = vmatprep.subr.mxu0 0.0
    %202 = vmatpush1.msra.mxu0 %v71
    %203 = vmatprep.subr.mxu0 0.0
    %204 = vmatpush1.msra.mxu0 %v68
    %205 = vmatprep.subr.mxu0 0.0
    %206 = vmatpush1.msra.mxu0 %v65
    %207 = vmatprep.subr.mxu0 0.0
    %208 = vmatpush1.msra.mxu0 %v62
    %209 = vmatprep.subr.mxu0 0.0
    %210 = vmatpush1.msra.mxu0 %v59
    %211 = vmatprep.subr.mxu0 0.0
    %212 = vmatpush1.msra.mxu0 %v56
    %213 = vmatprep.subr.mxu0 0.0
    %214 = vmatpush1.msra.mxu0 %v53
    %215 = vmatprep.subr.mxu0 0.0
    %216 = vmatpush1.msra.mxu0 %v50
    %217 = vmatprep.subr.mxu0 0.0
    %218 = vmatpush1.msra.mxu0 %v47
    %219 = vmatprep.subr.mxu0 0.0
    %220 = vmatpush2.msra.mxu0 0.0
    %221 = vmatprep.subr.mxu0 0.0
    %222 = vmatpush2.msra.mxu0 0.0
    %223 = vmatprep.subr.mxu0 0.0
    %224 = vmatpush2.msra.mxu0 0.0
    %225 = vmatprep.subr.mxu0 0.0
    %226 = vmatpush2.msra.mxu0 0.0
    %227 = vmatprep.subr.mxu0 0.0
    %228 = vmatpush2.msra.mxu0 0.0
    %229 = vmatprep.subr.mxu0 0.0
    %230 = vmatpush2.msra.mxu0 0.0
    %231 = vmatprep.subr.mxu0 0.0
    %232 = vmatpush2.msra.mxu0 0.0
    %233 = vmatprep.subr.mxu0 0.0
    %234 = vmatpush2.msra.mxu0 0.0
    %235 = vmatprep.subr.mxu0 0.0
    %236 = vmatpush2.msra.mxu0 0.0
    %237 = vmatprep.subr.mxu0 0.0
    %238 = vmatpush2.msra.mxu0 0.0
    %239 = vmatprep.subr.mxu0 0.0
    %240 = vmatpush2.msra.mxu0 0.0
    %241 = vmatprep.subr.mxu0 0.0
    %242 = vmatpush2.msra.mxu0 0.0
    %243 = vmatprep.subr.mxu0 0.0
    %244 = vmatpush2.msra.mxu0 0.0
    %245 = vmatprep.subr.mxu0 0.0
    %246 = vmatpush2.msra.mxu0 0.0
    %247 = vmatprep.subr.mxu0 0.0
    %248 = vmatpush2.msra.mxu0 0.0
    %249 = vmatprep.subr.mxu0 0.0
    %250 = vmatpush2.msra.mxu0 0.0
    %251 = vmatprep.mubr.f32.mxu0 0.0
    %252 = vmatmul.mubr.f32.gmra.mxu0 %v43
    %v253 = vpop.f32.mrf.mxu0
    %v254 = vadd.f32 %v106, %v253
    %v255 = vpop.f32.mrf.mxu0
    %256 = vmatprep.mubr.f32.mxu0 0.0
    %257 = vmatmul.mubr.f32.gmra.mxu0 %v44
    %v258 = vpop.f32.mrf.mxu0
    %v259 = vadd.f32 %v106, %v258
    %v260 = vpop.f32.mrf.mxu0
    %261 = vdwg.mxu0
    %262 = vst [vmem:[#allocation7] sm:$0xff] %v177
    %263 = vst [vmem:[#allocation7 + $0x8] sm:$0xff] %v179
    %264 = vst [vmem:[#allocation7 + $0x10] sm:$0xff] %v254
    %265 = vst [vmem:[#allocation7 + $0x18] sm:$0xff] %v183
    %266 = vst [vmem:[#allocation7 + $0x20] sm:$0xff] %v185
    %267 = vst [vmem:[#allocation7 + $0x28] sm:$0xff] %v259
    // Predicated region
    $region22: #{tpu_custom_call.1} parent=1 // pred_check
      _
    $region23: #{tpu_custom_call.1} parent=1 // pred_check_branch
      %269 = sbr.rel (0) target = $region25
    $region24: #{tpu_custom_call.1} parent=1 // pred_region
      %s271 = ssub.s32 768, 768
      %272 = vsyncadd [#allocation4], %s271
      %s273 = sshll.u32 [#allocation7], 4
      %s274 = int_to_ptr.vmem [resolvable:$true] %s273
      %279 = dma.vmem_to_hbm [thread:$0]  %s274, 768, %s3, [#allocation4], 384, 384, 24
    $region25: #{tpu_custom_call.1} parent=1 // pred_fallthru
      _
    // Predicated region
    $region26: #{tpu_custom_call.1} parent=1 // pred_check
      _
    $region27: #{tpu_custom_call.1} parent=1 // pred_check_branch
      %281 = sbr.rel (0) target = $region29
    $region28: #{tpu_custom_call.1} parent=1 // pred_region
      %282 = dma.done [#allocation4], 768
    $region29: #{tpu_custom_call.1} parent=1 // pred_fallthru
      _
    %283 = vsyncpa [#allocation3], 1
    %284 = vsyncpa [#allocation6], 1
    %285 = vsyncpa [#allocation4], 1

</llo_original>
